<compile_context>
chip_gen: v6e
topology: v6e:2x2x1
jax: 0.10.0
libtpu: 0.0.40
codegen_flags: <defaults>
</compile_context>

<pallas_src>
import numpy as np
import jax
import jax.numpy as jnp
from jax.experimental import pallas as pl
from jax.experimental.pallas import tpu as pltpu

# ----------------------- model hyper-parameters (small) ----------------------
N_VOCAB = 50
EMBEDD = 32          # embedding dim (= Conv1d in_channels)
SEN_SIZE = 16        # sequence length
FILTERS = (2, 3, 4)  # conv kernel widths
FILTERS_NUMBER = 8   # out_channels per conv
BATCH = 2
DROPOUT = 0.5        # eval-mode dropout == identity

KMAX = max(FILTERS)                     # widest filter -> number of taps
WIN_POS = SEN_SIZE - min(FILTERS) + 1   # 15 window positions (widest out_len)
PAD_LEN = WIN_POS + KMAX - 1            # 18 padded time steps (2 zero frames)
FEAT = len(FILTERS) * FILTERS_NUMBER    # 24 pooled features
TABLE_W = KMAX * FEAT                   # 96 = per-tap projected channels

# masked max-pool is exact only because ReLU output >= 0 and every filter branch has
# at least one valid position (SEN_SIZE >= max filter width).
assert SEN_SIZE >= max(FILTERS)

# layout of the packed small-constant slab (all slice starts 8-row aligned, 128 lanes)
ROW_FCW = 0     # rows [0, 24)   cols [0, 2)  : fc weight, already transposed (24, 2)
ROW_MASK = 24   # rows [24, 39)  cols [0, 24) : 0/1 validity mask (15, 24)
ROW_BIAS = 40   # row  40        cols [0, 24) : fused conv bias (24,)
ROW_FCB = 48    # row  48        cols [0, 2)  : fc bias (2,)
CPACK_ROWS = 56


# --------------------------------- kernel ------------------------------------
def textcnn_kernel(tok_ref, table_ref, cpack_ref, out_ref):
    """Fused: one-hot token lookup into the (embedding @ conv-tap) table on the MXU,
    4 shifted adds (= all three conv widths), bias + ReLU, static-masked global
    max-pool, and the final fc matmul. Everything stays in VMEM."""
    B, L = tok_ref.shape                                # (2, 16)
    V = table_ref.shape[0]                              # 50

    # ---- embedding gather + per-tap conv projection as ONE 2-D matmul ----
    tok = tok_ref[...]                                                  # (B, L) int32
    vocab = jax.lax.broadcasted_iota(jnp.int32, (B, L, V), 2)
    onehot = (tok[:, :, None] == vocab).astype(jnp.float32)             # (B, L, V)
    y = jnp.dot(onehot.reshape(B * L, V), table_ref[...],
                preferred_element_type=jnp.float32)                     # (B*L, 96)
    y = y.reshape(B, L, TABLE_W)                                        # (B, 16, 96)

    # two zero frames so every (position, tap) read below is in-bounds; these frames
    # only reach positions the mask zeroes out before the max-pool.
    y = jnp.concatenate(
        [y, jnp.zeros((B, PAD_LEN - L, TABLE_W), jnp.float32)], axis=1)  # (B, 18, 96)

    # ---- multi-width conv = shifted adds over the per-tap 24-channel blocks ----
    h = y[:, 0:WIN_POS, 0:FEAT]
    for j in range(1, KMAX):                            # static unroll (3 adds)
        h = h + y[:, j:j + WIN_POS, j * FEAT:(j + 1) * FEAT]            # (B, 15, 24)

    bias = cpack_ref[ROW_BIAS:ROW_BIAS + 1, 0:FEAT]                     # (1, 24)
    h = jnp.maximum(h + bias[:, None, :], 0.0)                          # bias + ReLU

    # mask positions past each filter's valid out_len (ReLU >= 0, so 0 is neutral)
    mask = cpack_ref[ROW_MASK:ROW_MASK + WIN_POS, 0:FEAT]               # (15, 24)
    feat = jnp.max(h * mask[None, :, :], axis=1)                        # (B, 24)

    # TODO(synk): nn.Dropout is identity in eval mode; training-time random masking
    # is intentionally not modeled here.

    fcw = cpack_ref[ROW_FCW:ROW_FCW + FEAT, 0:2]                        # (24, 2)
    fcb = cpack_ref[ROW_FCB:ROW_FCB + 1, 0:2]                           # (1, 2)
    out_ref[...] = jnp.dot(feat, fcw, preferred_element_type=jnp.float32) + fcb


# ------------------------ one-time host-side weight prep ----------------------
def pack_params(params):
    """Fold the embedding into the per-tap conv weights and pack every small constant
    into a single (56, 128) f32 slab. Done once, off the kernel's critical path."""
    emb = np.asarray(params["embedding"], np.float32)                   # (V, E)

    taps = []
    for j in range(KMAX):
        blocks = []
        for k in FILTERS:
            if j < k:
                wj = np.asarray(params[f"conv{k}_w"], np.float32)[j]    # (E, F)
                blocks.append(emb @ wj)                                 # (V, F)
            else:
                blocks.append(np.zeros((N_VOCAB, FILTERS_NUMBER), np.float32))
        taps.append(np.concatenate(blocks, axis=-1))                    # (V, 24)
    table = np.concatenate(taps, axis=-1).astype(np.float32)            # (V, 96)

    mask = np.zeros((WIN_POS, FEAT), np.float32)
    for i, k in enumerate(FILTERS):
        mask[: SEN_SIZE - k + 1, i * FILTERS_NUMBER:(i + 1) * FILTERS_NUMBER] = 1.0

    cpack = np.zeros((CPACK_ROWS, 128), np.float32)
    cpack[ROW_FCW:ROW_FCW + FEAT, 0:2] = np.asarray(params["fc_w"], np.float32).T
    cpack[ROW_MASK:ROW_MASK + WIN_POS, 0:FEAT] = mask
    cpack[ROW_BIAS, 0:FEAT] = np.concatenate(
        [np.asarray(params[f"conv{k}_b"], np.float32) for k in FILTERS])
    cpack[ROW_FCB, 0:2] = np.asarray(params["fc_b"], np.float32)

    return jnp.asarray(table), jnp.asarray(cpack)


# -------------------------------- wrapper -------------------------------------
def textcnn_forward(tokens, table, cpack):
    batch = tokens.shape[0]
    vmem = pltpu.MemorySpace.VMEM
    # Single kernel invocation, no grid, no pipelining: all operands VMEM-resident.
    # TODO(synk): at real serving batch sizes on v7x, grid over batch with
    # dimension_semantics=("parallel",) to use the second TensorCore.
    return pl.pallas_call(
        textcnn_kernel,
        out_shape=jax.ShapeDtypeStruct((batch, 2), jnp.float32),
        in_specs=[pl.BlockSpec(memory_space=vmem),
                  pl.BlockSpec(memory_space=vmem),
                  pl.BlockSpec(memory_space=vmem)],
        out_specs=pl.BlockSpec(memory_space=vmem),
    )(tokens.astype(jnp.int32), table, cpack)


# --------------------------- deterministic params -----------------------------
def init_params(key):
    keys = jax.random.split(key, 3 + 2 * len(FILTERS))
    params = {
        "embedding": jax.random.normal(keys[0], (N_VOCAB, EMBEDD), jnp.float32) * 0.1,
        "fc_w": jax.random.normal(keys[1], (2, FEAT), jnp.float32) * 0.1,
        "fc_b": jax.random.normal(keys[2], (2,), jnp.float32) * 0.1,
    }
    for i, k in enumerate(FILTERS):
        params[f"conv{k}_w"] = jax.random.normal(
            keys[3 + 2 * i], (k, EMBEDD, FILTERS_NUMBER), jnp.float32) * 0.1
        params[f"conv{k}_b"] = jax.random.normal(
            keys[4 + 2 * i], (FILTERS_NUMBER,), jnp.float32) * 0.1
    return params


# ------------------------------ plain-JAX reference ---------------------------
def reference_forward(tokens, params):
    x = jnp.take(params["embedding"], tokens, axis=0).astype(jnp.float32)  # (B, L, E)
    feats = []
    for k in FILTERS:
        w = params[f"conv{k}_w"]                      # (k, E, F)
        b = params[f"conv{k}_b"]
        out_len = SEN_SIZE - k + 1
        acc = jnp.zeros((tokens.shape[0], out_len, FILTERS_NUMBER), jnp.float32)
        for j in range(k):
            acc = acc + jnp.einsum("ble,ef->blf", x[:, j:j + out_len, :], w[j])
        acc = jnp.maximum(acc + b[None, None, :], 0.0)
        feats.append(jnp.max(acc, axis=1))
    feat = jnp.concatenate(feats, axis=-1)
    return feat @ params["fc_w"].T + params["fc_b"][None, :]


# ----------------------------------- main -------------------------------------
if __name__ == "__main__":
    key = jax.random.PRNGKey(0)
    pkey, tkey = jax.random.split(key)
    params = init_params(pkey)
    # note: all token ids must be < N_VOCAB (out-of-range ids would embed to zero)
    tokens = jax.random.randint(tkey, (BATCH, SEN_SIZE), 0, N_VOCAB, dtype=jnp.int32)

    table, cpack = pack_params(params)      # one-time weight prep (host side)
    out = jax.block_until_ready(textcnn_forward(tokens, table, cpack))

    ref = reference_forward(tokens, params)
    assert out.shape == (BATCH, 2)
    assert jnp.allclose(out, ref, atol=1e-4, rtol=1e-4), (out, ref)
    print("KERNEL_OK")
</pallas_src>

<mosaic_0001>
module attributes {stable_mosaic.version = 11 : i64} {
  func.func @textcnn_kernel(%arg0: memref<2x16xi32, #tpu.memory_space<vmem>>, %arg1: memref<50x96xf32, #tpu.memory_space<vmem>>, %arg2: memref<56x128xf32, #tpu.memory_space<vmem>>, %arg3: memref<2x2xf32, #tpu.memory_space<vmem>>) attributes {dimension_semantics = [], scalar_prefetch = 0 : i64, scratch_operands = 0 : i64, tpu.core_type = #tpu.core_type<tc>} {
    %c0 = arith.constant 0 : index
    %c0_0 = arith.constant 0 : index
    %0 = vector.load %arg0[%c0, %c0_0] : memref<2x16xi32, #tpu.memory_space<vmem>>, vector<2x16xi32>
    %1 = tpu.iota {dimensions = array<i32: 2>} : vector<2x16x50xi32>
    %2 = vector.shape_cast %0 : vector<2x16xi32> to vector<2x16x1xi32>
    %3 = vector.broadcast %2 : vector<2x16x1xi32> to vector<2x16x50xi32>
    %4 = arith.cmpi eq, %3, %1 : vector<2x16x50xi32>
    %5 = arith.extui %4 : vector<2x16x50xi1> to vector<2x16x50xi32>
    %6 = arith.sitofp %5 : vector<2x16x50xi32> to vector<2x16x50xf32>
    %7 = vector.shape_cast %6 : vector<2x16x50xf32> to vector<32x50xf32>
    %c0_1 = arith.constant 0 : index
    %c0_2 = arith.constant 0 : index
    %8 = vector.load %arg1[%c0_1, %c0_2] : memref<50x96xf32, #tpu.memory_space<vmem>>, vector<50x96xf32>
    %cst = arith.constant dense<0.000000e+00> : vector<32x96xf32>
    %9 = tpu.matmul %7, %8, %cst {dimension_numbers = #tpu.dot_dimension_numbers<[1], [0], [0], [1], [0, 0, 1, 1], [], []>} : vector<32x50xf32>, vector<50x96xf32>, vector<32x96xf32> -> vector<32x96xf32>
    %10 = vector.shape_cast %9 : vector<32x96xf32> to vector<2x16x96xf32>
    %cst_3 = arith.constant 0.000000e+00 : f32
    %11 = vector.broadcast %cst_3 : f32 to vector<2x2x96xf32>
    %12 = tpu.concatenate %10, %11 in 1 : vector<2x16x96xf32>, vector<2x2x96xf32> -> vector<2x18x96xf32>
    %13 = vector.extract_strided_slice %12 {offsets = [0, 0, 0], sizes = [2, 15, 24], strides = [1, 1, 1]} : vector<2x18x96xf32> to vector<2x15x24xf32>
    %14 = vector.extract_strided_slice %12 {offsets = [0, 1, 24], sizes = [2, 15, 24], strides = [1, 1, 1]} : vector<2x18x96xf32> to vector<2x15x24xf32>
    %15 = arith.addf %13, %14 : vector<2x15x24xf32>
    %16 = vector.extract_strided_slice %12 {offsets = [0, 2, 48], sizes = [2, 15, 24], strides = [1, 1, 1]} : vector<2x18x96xf32> to vector<2x15x24xf32>
    %17 = arith.addf %15, %16 : vector<2x15x24xf32>
    %18 = vector.extract_strided_slice %12 {offsets = [0, 3, 72], sizes = [2, 15, 24], strides = [1, 1, 1]} : vector<2x18x96xf32> to vector<2x15x24xf32>
    %19 = arith.addf %17, %18 : vector<2x15x24xf32>
    %c40 = arith.constant 40 : index
    %c0_4 = arith.constant 0 : index
    %20 = vector.load %arg2[%c40, %c0_4] : memref<56x128xf32, #tpu.memory_space<vmem>>, vector<1x24xf32>
    %21 = vector.shape_cast %20 : vector<1x24xf32> to vector<1x1x24xf32>
    %22 = vector.broadcast %21 : vector<1x1x24xf32> to vector<2x15x24xf32>
    %23 = arith.addf %19, %22 : vector<2x15x24xf32>
    %cst_5 = arith.constant 0.000000e+00 : f32
    %24 = vector.broadcast %cst_5 : f32 to vector<2x15x24xf32>
    %25 = arith.maximumf %23, %24 : vector<2x15x24xf32>
    %c24 = arith.constant 24 : index
    %c0_6 = arith.constant 0 : index
    %26 = vector.load %arg2[%c24, %c0_6] : memref<56x128xf32, #tpu.memory_space<vmem>>, vector<15x24xf32>
    %27 = vector.shape_cast %26 : vector<15x24xf32> to vector<1x15x24xf32>
    %28 = vector.broadcast %27 : vector<1x15x24xf32> to vector<2x15x24xf32>
    %29 = arith.mulf %25, %28 : vector<2x15x24xf32>
    %cst_7 = arith.constant dense<0xFF800000> : vector<2x24xf32>
    %30 = vector.multi_reduction <maximumf>, %29, %cst_7 [1] : vector<2x15x24xf32> to vector<2x24xf32>
    %c0_8 = arith.constant 0 : index
    %c0_9 = arith.constant 0 : index
    %31 = vector.load %arg2[%c0_8, %c0_9] : memref<56x128xf32, #tpu.memory_space<vmem>>, vector<24x2xf32>
    %c48 = arith.constant 48 : index
    %c0_10 = arith.constant 0 : index
    %32 = vector.load %arg2[%c48, %c0_10] : memref<56x128xf32, #tpu.memory_space<vmem>>, vector<1x2xf32>
    %cst_11 = arith.constant dense<0.000000e+00> : vector<2x2xf32>
    %33 = tpu.matmul %30, %31, %cst_11 {dimension_numbers = #tpu.dot_dimension_numbers<[1], [0], [0], [1], [0, 0, 1, 1], [], []>} : vector<2x24xf32>, vector<24x2xf32>, vector<2x2xf32> -> vector<2x2xf32>
    %34 = vector.broadcast %32 : vector<1x2xf32> to vector<2x2xf32>
    %35 = arith.addf %33, %34 : vector<2x2xf32>
    %c0_12 = arith.constant 0 : index
    %c0_13 = arith.constant 0 : index
    %36 = vector.load %arg3[%c0_12, %c0_13] : memref<2x2xf32, #tpu.memory_space<vmem>>, vector<2x2xf32>
    tpu.vector_store %arg3[%c0_12, %c0_13], %35 {strides = array<i32>} : memref<2x2xf32, #tpu.memory_space<vmem>>, vector<2x2xf32>,
    return
  }
}

</mosaic_0001>

<llo_original>
// kernel: tpu_custom_call.1
$region0: #{tpu_custom_call.1}
  #allocation0 [shape = 'u32[]', space=smem, size = 0x4, offset = 0x4, fixed_abs, tag = 'smem constant byte address 0x4 - core index']
  #allocation1 [shape = 'u32[144,128]{1,0:T(1,128)}', space=vmem, size = 0x12000, scoped, tag = 'internal scratch']
  %s0 = inlined_call_operand.hbm [shape: s32[2,16], index: 0, kind: input, shape index: {}]
  %s1 = inlined_call_operand.hbm [shape: f32[50,96], index: 1, kind: input, shape index: {}]
  %s2 = inlined_call_operand.hbm [shape: f32[56,128], index: 2, kind: input, shape index: {}]
  %s3 = inlined_call_operand.hbm [shape: f32[2,2], index: 3, kind: output, shape index: {}]
  %s4 = sld [smem:[#allocation0]]
  $region34: #{tpu_custom_call.1} parent=0
    _
  %s6 = ssub.s32 1, %s4
  %s7 = scalar_select 0, %s6, %s4
  $region1: #{tpu_custom_call.1} parent=0
    #allocation2 [shape = 'u8[1024]{0}', space=vmem, size = 0x400, scoped, tag = 'input window, operand 0, single buffered']
    #allocation3 [shape = 's32[1]{0}', space=sflag, size = 0x4, scoped, tag = 'scoped memory for tpu_custom_call.1']
    #allocation4 [shape = 's32[1]{0}', space=sflag, size = 0x4, scoped, tag = 'scoped memory for tpu_custom_call.1']
    #allocation5 [shape = 'u8[28672]{0}', space=vmem, size = 0x7000, scoped, tag = 'input window, operand 1, single buffered']
    #allocation6 [shape = 's32[1]{0}', space=sflag, size = 0x4, scoped, tag = 'scoped memory for tpu_custom_call.1']
    #allocation7 [shape = 'u8[28672]{0}', space=vmem, size = 0x7000, scoped, tag = 'input window, operand 2, single buffered']
    #allocation8 [shape = 'u8[1024]{0}', space=vmem, size = 0x400, scoped, tag = 'output window, operand 0, single buffered']
    %8 = vsyncpa [#allocation3], 0
    %9 = vsyncpa [#allocation6], 0
    %10 = vsyncpa [#allocation4], 0
    // Predicated region
    $region2: #{tpu_custom_call.1} parent=1 // pred_check
      _
    $region3: #{tpu_custom_call.1} parent=1 // pred_check_branch
      %12 = sbr.rel (0) target = $region5
    $region4: #{tpu_custom_call.1} parent=1 // pred_region
      %s14 = ssub.s32 32, 32
      %15 = vsyncadd [#allocation3], %s14
      %s17 = sshll.u32 [#allocation2], 4
      %s18 = int_to_ptr.vmem [resolvable:$true] %s17
      %20 = dma.hbm_to_vmem [thread:$0]  %s0, 32, %s18, [#allocation3]
    $region5: #{tpu_custom_call.1} parent=1 // pred_fallthru
      _
    // Predicated region
    $region6: #{tpu_custom_call.1} parent=1 // pred_check
      _
    $region7: #{tpu_custom_call.1} parent=1 // pred_check_branch
      %22 = sbr.rel (0) target = $region9
    $region8: #{tpu_custom_call.1} parent=1 // pred_region
      %s24 = ssub.s32 896, 896
      %25 = vsyncadd [#allocation6], %s24
      %s26 = sshll.u32 [#allocation5], 4
      %s27 = int_to_ptr.vmem [resolvable:$true] %s26
      %32 = dma.hbm_to_vmem [thread:$0]  %s1, 896, %s27, [#allocation6], 128, 128, 8
    $region9: #{tpu_custom_call.1} parent=1 // pred_fallthru
      _
    // Predicated region
    $region10: #{tpu_custom_call.1} parent=1 // pred_check
      _
    $region11: #{tpu_custom_call.1} parent=1 // pred_check_branch
      %34 = sbr.rel (0) target = $region13
    $region12: #{tpu_custom_call.1} parent=1 // pred_region
      %s36 = ssub.s32 896, 896
      %37 = vsyncadd [#allocation6], %s36
      %s38 = sshll.u32 [#allocation7], 4
      %s39 = int_to_ptr.vmem [resolvable:$true] %s38
      %44 = dma.hbm_to_vmem [thread:$0]  %s2, 896, %s39, [#allocation6], 128, 128, 8
    $region13: #{tpu_custom_call.1} parent=1 // pred_fallthru
      _
    // Predicated region
    $region14: #{tpu_custom_call.1} parent=1 // pred_check
      _
    $region15: #{tpu_custom_call.1} parent=1 // pred_check_branch
      %46 = sbr.rel (0) target = $region17
    $region16: #{tpu_custom_call.1} parent=1 // pred_region
      %47 = dma.done [#allocation3], 32
    $region17: #{tpu_custom_call.1} parent=1 // pred_fallthru
      _
    // Predicated region
    $region18: #{tpu_custom_call.1} parent=1 // pred_check
      _
    $region19: #{tpu_custom_call.1} parent=1 // pred_check_branch
      %49 = sbr.rel (0) target = $region21
    $region20: #{tpu_custom_call.1} parent=1 // pred_region
      %50 = dma.done [#allocation6], 896
    $region21: #{tpu_custom_call.1} parent=1 // pred_fallthru
      _
    // Predicated region
    $region22: #{tpu_custom_call.1} parent=1 // pred_check
      _
    $region23: #{tpu_custom_call.1} parent=1 // pred_check_branch
      %52 = sbr.rel (0) target = $region25
    $region24: #{tpu_custom_call.1} parent=1 // pred_region
      %53 = dma.done [#allocation6], 896
    $region25: #{tpu_custom_call.1} parent=1 // pred_fallthru
      _
    %v54 = vld [vmem:[#allocation2] sm:$0x3]
    %v55 = vlaneseq
    %v56 = vand.u32 %v55, 127
    %v57 = vlaneseq
    %v58 = vshrl.u32 %v57, 7
    %v59 = vsub.s32 0, %v58
    %v60 = vrot.slane %v54, %v59
    %62 = vbcast.lane.b32.xlu0 %v60, 256
    %v63 = vpop.permute.xlu0 %62
    %s65 = sor.u32 256, 8
    %66 = vbcast.lane.b32.xlu0 %v60, %s65
    %v67 = vpop.permute.xlu0 %66
    %v68 = vlaneseq
    %v69 = vshrl.u32 %v68, 7
    %v70 = vsub.s32 1, %v69
    %v71 = vrot.slane %v54, %v70
    %73 = vbcast.lane.b32.xlu0 %v71, 256
    %v74 = vpop.permute.xlu0 %73
    %s76 = sor.u32 256, 8
    %77 = vbcast.lane.b32.xlu0 %v71, %s76
    %v78 = vpop.permute.xlu0 %77
    %vm79 = vcmp.eq.s32.totalorder %v63, %v56
    %vm80 = vcmp.eq.s32.totalorder %v67, %v56
    %vm81 = vcmp.eq.s32.totalorder %v74, %v56
    %vm82 = vcmp.eq.s32.totalorder %v78, %v56
    %v83 = vsel %vm79, 1, 0
    %v84 = vsel %vm80, 1, 0
    %v85 = vsel %vm81, 1, 0
    %v86 = vsel %vm82, 1, 0
    %v87 = vcvt.s32.f32 %v83
    %v88 = vcvt.s32.f32 %v84
    %v89 = vcvt.s32.f32 %v85
    %v90 = vcvt.s32.f32 %v86
    %v91 = vld [vmem:[#allocation5] sm:$0xff]
    %v92 = vld [vmem:[#allocation5 + $0x8] sm:$0xff]
    %v93 = vld [vmem:[#allocation5 + $0x10] sm:$0xff]
    %v94 = vld [vmem:[#allocation5 + $0x18] sm:$0xff]
    %v95 = vld [vmem:[#allocation5 + $0x20] sm:$0xff]
    %v96 = vld [vmem:[#allocation5 + $0x28] sm:$0xff]
    %v97 = vld [vmem:[#allocation5 + $0x30] sm:$0x3]
    %vm98 = vcmask 408576
    %v100 = vsel %vm98, %v87, 0
    %v103 = vsel %vm98, %v88, 0
    %v106 = vsel %vm98, %v89, 0
    %v109 = vsel %vm98, %v90, 0
    %vm111 = vcmask 1041408
    %v113 = vsel %vm111, %v97, 0
    %115 = vmatprep.subr.mxu0 0.0
    %116 = vmatpush1.msra.mxu0 0.0
    %117 = vmatprep.subr.mxu0 0.0
    %118 = vmatpush1.msra.mxu0 0.0
    %119 = vmatprep.subr.mxu0 0.0
    %120 = vmatpush1.msra.mxu0 0.0
    %121 = vmatprep.subr.mxu0 0.0
    %122 = vmatpush1.msra.mxu0 0.0
    %123 = vmatprep.subr.mxu0 0.0
    %124 = vmatpush1.msra.mxu0 0.0
    %125 = vmatprep.subr.mxu0 0.0
    %126 = vmatpush1.msra.mxu0 0.0
    %127 = vmatprep.subr.mxu0 0.0
    %128 = vmatpush1.msra.mxu0 0.0
    %129 = vmatprep.subr.mxu0 0.0
    %130 = vmatpush1.msra.mxu0 0.0
    %131 = vmatprep.subr.mxu0 0.0
    %132 = vmatpush1.msra.mxu0 0.0
    %133 = vmatprep.subr.mxu0 0.0
    %134 = vmatpush1.msra.mxu0 %v113
    %135 = vmatprep.subr.mxu0 0.0
    %136 = vmatpush1.msra.mxu0 %v96
    %137 = vmatprep.subr.mxu0 0.0
    %138 = vmatpush1.msra.mxu0 %v95
    %139 = vmatprep.subr.mxu0 0.0
    %140 = vmatpush1.msra.mxu0 %v94
    %141 = vmatprep.subr.mxu0 0.0
    %142 = vmatpush1.msra.mxu0 %v93
    %143 = vmatprep.subr.mxu0 0.0
    %144 = vmatpush1.msra.mxu0 %v92
    %145 = vmatprep.subr.mxu0 0.0
    %146 = vmatpush1.msra.mxu0 %v91
    %147 = vmatprep.subr.mxu0 0.0
    %148 = vmatpush2.msra.mxu0 0.0
    %149 = vmatprep.subr.mxu0 0.0
    %150 = vmatpush2.msra.mxu0 0.0
    %151 = vmatprep.subr.mxu0 0.0
    %152 = vmatpush2.msra.mxu0 0.0
    %153 = vmatprep.subr.mxu0 0.0
    %154 = vmatpush2.msra.mxu0 0.0
    %155 = vmatprep.subr.mxu0 0.0
    %156 = vmatpush2.msra.mxu0 0.0
    %157 = vmatprep.subr.mxu0 0.0
    %158 = vmatpush2.msra.mxu0 0.0
    %159 = vmatprep.subr.mxu0 0.0
    %160 = vmatpush2.msra.mxu0 0.0
    %161 = vmatprep.subr.mxu0 0.0
    %162 = vmatpush2.msra.mxu0 0.0
    %163 = vmatprep.subr.mxu0 0.0
    %164 = vmatpush2.msra.mxu0 0.0
    %165 = vmatprep.subr.mxu0 0.0
    %166 = vmatpush2.msra.mxu0 0.0
    %167 = vmatprep.subr.mxu0 0.0
    %168 = vmatpush2.msra.mxu0 0.0
    %169 = vmatprep.subr.mxu0 0.0
    %170 = vmatpush2.msra.mxu0 0.0
    %171 = vmatprep.subr.mxu0 0.0
    %172 = vmatpush2.msra.mxu0 0.0
    %173 = vmatprep.subr.mxu0 0.0
    %174 = vmatpush2.msra.mxu0 0.0
    %175 = vmatprep.subr.mxu0 0.0
    %176 = vmatpush2.msra.mxu0 0.0
    %177 = vmatprep.subr.mxu0 0.0
    %178 = vmatpush2.msra.mxu0 0.0
    %179 = vmatprep.mubr.f32.mxu0 0.0
    %180 = vmatmul.mubr.f32.gmra.mxu0 %v100
    %v181 = vpop.f32.mrf.mxu0
    %v182 = vadd.f32 0.0, %v181
    %v183 = vpop.f32.mrf.mxu0
    %184 = vmatprep.mubr.f32.mxu0 0.0
    %185 = vmatmul.mubr.f32.gmra.mxu0 %v103
    %v186 = vpop.f32.mrf.mxu0
    %v187 = vadd.f32 0.0, %v186
    %v188 = vpop.f32.mrf.mxu0
    %189 = vmatprep.mubr.f32.mxu0 0.0
    %190 = vmatmul.mubr.f32.gmra.mxu0 %v106
    %v191 = vpop.f32.mrf.mxu0
    %v192 = vadd.f32 0.0, %v191
    %v193 = vpop.f32.mrf.mxu0
    %194 = vmatprep.mubr.f32.mxu0 0.0
    %195 = vmatmul.mubr.f32.gmra.mxu0 %v109
    %v196 = vpop.f32.mrf.mxu0
    %v197 = vadd.f32 0.0, %v196
    %v198 = vpop.f32.mrf.mxu0
    %199 = vdwg.mxu0
    %vm204 = vcmask 1046528
    %v205 = vrot.slane %v182, 1
    %v206 = vrot.slane %v187, 1
    %v207 = vsel %vm204, %v205, %v206
    %v208 = vrot.slane %v192, 1
    %v209 = vrot.slane %v197, 1
    %v210 = vsel %vm204, %v208, %v209
    %211 = vrot.lane.b32.xlu0 %v207, 104
    %v212 = vpop.permute.xlu0 %211
    %213 = vrot.lane.b32.xlu0 %v206, 104
    %v214 = vpop.permute.xlu0 %213
    %215 = vrot.lane.b32.xlu0 %v210, 104
    %v216 = vpop.permute.xlu0 %215
    %217 = vrot.lane.b32.xlu0 %v209, 104
    %v218 = vpop.permute.xlu0 %217
    %v223 = vadd.f32 %v182, %v212
    %v224 = vadd.f32 %v187, %v214
    %v225 = vadd.f32 %v192, %v216
    %v226 = vadd.f32 %v197, %v218
    %vm228 = vcmask 1045504
    %v229 = vrot.slane %v182, 2
    %v230 = vrot.slane %v187, 2
    %v231 = vsel %vm228, %v229, %v230
    %v232 = vrot.slane 0.0, 2
    %v233 = vsel %vm228, %v230, %v232
    %v234 = vrot.slane %v192, 2
    %v235 = vrot.slane %v197, 2
    %v236 = vsel %vm228, %v234, %v235
    %v237 = vsel %vm228, %v235, %v232
    %238 = vrot.lane.b32.xlu0 %v231, 80
    %v239 = vpop.permute.xlu0 %238
    %240 = vrot.lane.b32.xlu0 %v233, 80
    %v241 = vpop.permute.xlu0 %240
    %242 = vrot.lane.b32.xlu0 %v236, 80
    %v243 = vpop.permute.xlu0 %242
    %244 = vrot.lane.b32.xlu0 %v237, 80
    %v245 = vpop.permute.xlu0 %244
    %v250 = vadd.f32 %v223, %v239
    %v251 = vadd.f32 %v224, %v241
    %v252 = vadd.f32 %v225, %v243
    %v253 = vadd.f32 %v226, %v245
    %vm254 = vcmask 1044480
    %v255 = vrot.slane %v182, 3
    %v256 = vrot.slane %v187, 3
    %v257 = vsel %vm254, %v255, %v256
    %v258 = vrot.slane 0.0, 3
    %v259 = vsel %vm254, %v256, %v258
    %v260 = vrot.slane %v192, 3
    %v261 = vrot.slane %v197, 3
    %v262 = vsel %vm254, %v260, %v261
    %v263 = vsel %vm254, %v261, %v258
    %264 = vrot.lane.b32.xlu0 %v257, 56
    %v265 = vpop.permute.xlu0 %264
    %266 = vrot.lane.b32.xlu0 %v259, 56
    %v267 = vpop.permute.xlu0 %266
    %268 = vrot.lane.b32.xlu0 %v262, 56
    %v269 = vpop.permute.xlu0 %268
    %270 = vrot.lane.b32.xlu0 %v263, 56
    %v271 = vpop.permute.xlu0 %270
    %v276 = vadd.f32 %v250, %v265
    %v277 = vadd.f32 %v251, %v267
    %v278 = vadd.f32 %v252, %v269
    %v279 = vadd.f32 %v253, %v271
    %v280 = vld [vmem:[#allocation7 + $0x28] sm:$0x1]
    %v281 = vlaneseq
    %v282 = vshrl.u32 %v281, 7
    %v283 = vsub.s32 0, %v282
    %v284 = vrot.slane %v280, %v283
    %v285 = vadd.f32 %v276, %v284
    %v286 = vadd.f32 %v277, %v284
    %v287 = vadd.f32 %v278, %v284
    %v288 = vadd.f32 %v279, %v284
    %v289 = vmax.f32 %v285, 0.0
    %v290 = vmax.f32 %v286, 0.0
    %v291 = vmax.f32 %v287, 0.0
    %v292 = vmax.f32 %v288, 0.0
    %v293 = vld [vmem:[#allocation7 + $0x18] sm:$0xff]
    %v294 = vld [vmem:[#allocation7 + $0x20] sm:$0x7f]
    %v295 = vmul.f32 %v289, %v293
    %v296 = vmul.f32 %v290, %v294
    %v297 = vmul.f32 %v291, %v293
    %v298 = vmul.f32 %v292, %v294
    %vm299 = vcmask 195584
    %v300 = vsel %vm299, %v295, -inf
    %vm301 = vcmask 194560
    %v302 = vsel %vm301, %v296, -inf
    %v303 = vmax.f32 %v300, %v302
    %v304 = vrot.slane %v303, 4
    %v305 = vmax.f32 %v303, %v304
    %v306 = vrot.slane %v305, 2
    %v307 = vmax.f32 %v305, %v306
    %v308 = vrot.slane %v307, 1
    %v309 = vmax.f32 %v307, %v308
    %v310 = vsel %vm299, %v297, -inf
    %v311 = vsel %vm301, %v298, -inf
    %v312 = vmax.f32 %v310, %v311
    %v313 = vrot.slane %v312, 4
    %v314 = vmax.f32 %v312, %v313
    %v315 = vrot.slane %v314, 2
    %v316 = vmax.f32 %v314, %v315
    %v317 = vrot.slane %v316, 1
    %v318 = vmax.f32 %v316, %v317
    %v319 = vld [vmem:[#allocation7] sm:$0xff]
    %v320 = vld [vmem:[#allocation7 + $0x8] sm:$0xff]
    %v321 = vld [vmem:[#allocation7 + $0x10] sm:$0xff]
    %v322 = vld [vmem:[#allocation7 + $0x30] sm:$0x1]
    %v323 = vlaneseq
    %v324 = vshrl.u32 %v323, 7
    %v325 = vsub.s32 0, %v324
    %v326 = vrot.slane %v322, %v325
    %vm329 = vcmask 1041409
    %v330 = vsel %vm329, %v318, %v309
    %v331 = vsel %vm299, %v330, 0
    %333 = vmatprep.subr.mxu0 0.0
    %334 = vmatpush1.msra.mxu0 0.0
    %335 = vmatprep.subr.mxu0 0.0
    %336 = vmatpush1.msra.mxu0 0.0
    %337 = vmatprep.subr.mxu0 0.0
    %338 = vmatpush1.msra.mxu0 0.0
    %339 = vmatprep.subr.mxu0 0.0
    %340 = vmatpush1.msra.mxu0 0.0
    %341 = vmatprep.subr.mxu0 0.0
    %342 = vmatpush1.msra.mxu0 0.0
    %343 = vmatprep.subr.mxu0 0.0
    %344 = vmatpush1.msra.mxu0 0.0
    %345 = vmatprep.subr.mxu0 0.0
    %346 = vmatpush1.msra.mxu0 0.0
    %347 = vmatprep.subr.mxu0 0.0
    %348 = vmatpush1.msra.mxu0 0.0
    %349 = vmatprep.subr.mxu0 0.0
    %350 = vmatpush1.msra.mxu0 0.0
    %351 = vmatprep.subr.mxu0 0.0
    %352 = vmatpush1.msra.mxu0 0.0
    %353 = vmatprep.subr.mxu0 0.0
    %354 = vmatpush1.msra.mxu0 0.0
    %355 = vmatprep.subr.mxu0 0.0
    %356 = vmatpush1.msra.mxu0 0.0
    %357 = vmatprep.subr.mxu0 0.0
    %358 = vmatpush1.msra.mxu0 0.0
    %359 = vmatprep.subr.mxu0 0.0
    %360 = vmatpush1.msra.mxu0 %v321
    %361 = vmatprep.subr.mxu0 0.0
    %362 = vmatpush1.msra.mxu0 %v320
    %363 = vmatprep.subr.mxu0 0.0
    %364 = vmatpush1.msra.mxu0 %v319
    %365 = vmatprep.subr.mxu0 0.0
    %366 = vmatpush2.msra.mxu0 0.0
    %367 = vmatprep.subr.mxu0 0.0
    %368 = vmatpush2.msra.mxu0 0.0
    %369 = vmatprep.subr.mxu0 0.0
    %370 = vmatpush2.msra.mxu0 0.0
    %371 = vmatprep.subr.mxu0 0.0
    %372 = vmatpush2.msra.mxu0 0.0
    %373 = vmatprep.subr.mxu0 0.0
    %374 = vmatpush2.msra.mxu0 0.0
    %375 = vmatprep.subr.mxu0 0.0
    %376 = vmatpush2.msra.mxu0 0.0
    %377 = vmatprep.subr.mxu0 0.0
    %378 = vmatpush2.msra.mxu0 0.0
    %379 = vmatprep.subr.mxu0 0.0
    %380 = vmatpush2.msra.mxu0 0.0
    %381 = vmatprep.subr.mxu0 0.0
    %382 = vmatpush2.msra.mxu0 0.0
    %383 = vmatprep.subr.mxu0 0.0
    %384 = vmatpush2.msra.mxu0 0.0
    %385 = vmatprep.subr.mxu0 0.0
    %386 = vmatpush2.msra.mxu0 0.0
    %387 = vmatprep.subr.mxu0 0.0
    %388 = vmatpush2.msra.mxu0 0.0
    %389 = vmatprep.subr.mxu0 0.0
    %390 = vmatpush2.msra.mxu0 0.0
    %391 = vmatprep.subr.mxu0 0.0
    %392 = vmatpush2.msra.mxu0 0.0
    %393 = vmatprep.subr.mxu0 0.0
    %394 = vmatpush2.msra.mxu0 0.0
    %395 = vmatprep.subr.mxu0 0.0
    %396 = vmatpush2.msra.mxu0 0.0
    %397 = vmatprep.mubr.f32.mxu0 0.0
    %398 = vmatmul.mubr.f32.gmra.mxu0 %v331
    %v399 = vpop.f32.mrf.mxu0
    %v400 = vadd.f32 %v326, %v399
    %v401 = vpop.f32.mrf.mxu0
    %402 = vdwg.mxu0
    %vm403 = vcmask 9216
    %404 = vst.msk [vmem:[#allocation8] sm:$0x3] %vm403, %v400
    // Predicated region
    $region26: #{tpu_custom_call.1} parent=1 // pred_check
      _
    $region27: #{tpu_custom_call.1} parent=1 // pred_check_branch
      %406 = sbr.rel (0) target = $region29
    $region28: #{tpu_custom_call.1} parent=1 // pred_region
      %s408 = ssub.s32 32, 32
      %409 = vsyncadd [#allocation4], %s408
      %s411 = sshll.u32 [#allocation8], 4
      %s412 = int_to_ptr.vmem [resolvable:$true] %s411
      %414 = dma.vmem_to_hbm [thread:$0]  %s412, 32, %s3, [#allocation4]
    $region29: #{tpu_custom_call.1} parent=1 // pred_fallthru
      _
    // Predicated region
    $region30: #{tpu_custom_call.1} parent=1 // pred_check
      _
    $region31: #{tpu_custom_call.1} parent=1 // pred_check_branch
      %416 = sbr.rel (0) target = $region33
    $region32: #{tpu_custom_call.1} parent=1 // pred_region
      %417 = dma.done [#allocation4], 32
    $region33: #{tpu_custom_call.1} parent=1 // pred_fallthru
      _
    %418 = vsyncpa [#allocation3], 1
    %419 = vsyncpa [#allocation6], 1
    %420 = vsyncpa [#allocation4], 1

</llo_original>
